<compile_context>
chip_gen: v5e
topology: v5e:2x2
jax: 0.10.0
libtpu: 0.0.40
codegen_flags: <defaults>
</compile_context>

<pallas_src>
import functools

import jax
import jax.numpy as jnp
from jax import lax
from jax.experimental import pallas as pl
from jax.experimental.pallas import tpu as pltpu


def _quantile_loss_kernel(preds_ref, target_ref, out_ref, *, qrow, delta):
    """One grid step: pinball loss over a (R, TN) lane-dense tile.

    qrow  : per-row quantile coefficient (compile-time tuple, len == R).
    delta : shift for the negative branch (q - 1 -> delta = 1; the
            target-broadcast case folds the sum over quantiles into delta = Q).
    Writes this tile's partial sum into element (0, 0) of its (8, 128) output
    block; the wrapper sums all blocks and divides by the element count.
    """
    err = target_ref[...].astype(jnp.float32) - preds_ref[...].astype(jnp.float32)
    rows, lanes = err.shape

    if len(set(qrow)) == 1:
        qp = jnp.float32(qrow[0])
        qn = jnp.float32(qrow[0] - delta)
    else:
        rid = lax.broadcasted_iota(jnp.int32, (rows, lanes), 0)
        qp = jnp.full((rows, lanes), qrow[-1], dtype=jnp.float32)
        for r in range(rows - 1):
            qp = jnp.where(rid == r, jnp.float32(qrow[r]), qp)
        qn = qp - jnp.float32(delta)

    loss = err * jnp.where(err >= 0.0, qp, qn)

    s = jnp.sum(loss)                                    # per-tile partial sum
    r8 = lax.broadcasted_iota(jnp.int32, (8, 128), 0)
    c8 = lax.broadcasted_iota(jnp.int32, (8, 128), 1)
    out_ref[...] = jnp.where((r8 == 0) & (c8 == 0), s, 0.0)


def quantile_loss(preds, target, quantiles=(0.1, 0.5, 0.9), *,
                  tile_vmem_bytes=4 * 1024 * 1024):
    """Mirrors QuantileLoss.forward: scalar mean pinball loss."""
    quantiles = tuple(float(q) for q in quantiles)
    Q = len(quantiles)
    if Q < 1:
        raise ValueError("need at least one quantile")

    # torch semantics: errors = target - preds (broadcast), unsqueeze if 1-D.
    err_shape = jnp.broadcast_shapes(jnp.shape(target), jnp.shape(preds))
    if len(err_shape) == 0:
        err_shape = (1, 1)
    elif len(err_shape) == 1:
        err_shape = (err_shape[0], 1)
    C = err_shape[-1]
    N = 1
    for d in err_shape[:-1]:
        N *= d

    # quantiles (1, Q) broadcast against errors (..., C).
    if C == Q:
        qrow, delta, L = quantiles, 1.0, Q                 # q_c per error column
    elif Q == 1:
        qrow, delta, L = (quantiles[0],) * C, 1.0, C
    elif C == 1:
        # Every error pairs with all Q quantiles; the sign test is identical for
        # all of them, so sum_j pinball(q_j, e) = e * (S if e >= 0 else S - Q).
        qrow, delta, L = (float(sum(quantiles)),), float(Q), Q
    else:
        raise ValueError(f"quantiles ({Q}) do not broadcast against errors "
                         f"last dim ({C})")
    total_elems = N * L

    # NOTE: broadcast_to is a no-op when preds/target already share a shape
    # (the common case); it only materializes when e.g. target is [N, 1].
    p2 = jnp.broadcast_to(preds, err_shape).reshape(N, C)
    t2 = jnp.broadcast_to(target, err_shape).reshape(N, C)

    # Lane-dense [C, N] layout (layout plumbing in the wrapper), zero-padded on
    # the lane axis: zero error contributes exactly zero loss, so no masking.
    sub_rows = max(8, -(-C // 8) * 8)                      # VMEM sublane footprint
    tn_target = max(128, (tile_vmem_bytes // (4 * sub_rows)) // 128 * 128)
    tn = min(tn_target, -(-N // 128) * 128)
    n_pad = -(-N // tn) * tn
    grid_n = n_pad // tn

    p_t = jnp.transpose(p2)                                # (C, N)
    t_t = jnp.transpose(t2)
    if n_pad != N:
        p_t = jnp.pad(p_t, ((0, 0), (0, n_pad - N)))
        t_t = jnp.pad(t_t, ((0, 0), (0, n_pad - N)))

    kernel = functools.partial(_quantile_loss_kernel, qrow=qrow, delta=delta)
    partials = pl.pallas_call(
        kernel,
        out_shape=jax.ShapeDtypeStruct((8 * grid_n, 128), jnp.float32),
        grid_spec=pltpu.PrefetchScalarGridSpec(
            num_scalar_prefetch=0,
            grid=(grid_n,),
            in_specs=[
                pl.BlockSpec((C, tn), lambda i: (0, i)),   # preds   [C, N_pad]
                pl.BlockSpec((C, tn), lambda i: (0, i)),   # target  [C, N_pad]
            ],
            out_specs=pl.BlockSpec((8, 128), lambda i: (i, 0)),
        ),
        compiler_params=pltpu.CompilerParams(
            dimension_semantics=("parallel",),
            vmem_limit_bytes=32 * 1024 * 1024,
        ),
    )(p_t, t_t)

    return jnp.sum(partials) / jnp.float32(total_elems)


def quantile_loss_ref(preds, target, quantiles=(0.1, 0.5, 0.9)):
    q = jnp.asarray(quantiles, dtype=jnp.float32).reshape(1, -1)
    errors = target.astype(jnp.float32) - preds.astype(jnp.float32)
    if errors.ndim == 1:
        errors = errors[:, None]
    loss = jnp.maximum(q * errors, (q - 1.0) * errors)
    return jnp.mean(loss)


if __name__ == "__main__":
    key = jax.random.PRNGKey(0)
    k1, k2 = jax.random.split(key)

    # Small shapes consistent with the module: N samples x 3 quantile preds.
    N, Q = 256, 3
    preds = jax.random.normal(k1, (N, Q), dtype=jnp.float32)
    target = jax.random.normal(k2, (N, Q), dtype=jnp.float32)

    out = quantile_loss(preds, target)
    out = jax.block_until_ready(out)

    ref = quantile_loss_ref(preds, target)
    assert jnp.allclose(out, ref, rtol=1e-5, atol=1e-5), (out, ref)

    print("KERNEL_OK")
</pallas_src>

<mosaic_0001>
module attributes {stable_mosaic.version = 11 : i64} {
  func.func @_quantile_loss_kernel(%arg0: i32, %arg1: memref<3x256xf32, #tpu.memory_space<vmem>>, %arg2: memref<3x256xf32, #tpu.memory_space<vmem>>, %arg3: memref<8x128xf32, #tpu.memory_space<vmem>>) attributes {dimension_semantics = [#tpu.dimension_semantics<parallel>], iteration_bounds = array<i64: 1>, scalar_prefetch = 0 : i64, scratch_operands = 0 : i64, tpu.core_type = #tpu.core_type<tc>, window_params = [{transform_indices = @transform_0, window_bounds = array<i64: 3, 256>}, {transform_indices = @transform_1, window_bounds = array<i64: 3, 256>}, {transform_indices = @transform_2, window_bounds = array<i64: 8, 128>}]} {
    %c0 = arith.constant 0 : index
    %c0_0 = arith.constant 0 : index
    %0 = vector.load %arg2[%c0, %c0_0] : memref<3x256xf32, #tpu.memory_space<vmem>>, vector<3x256xf32>
    %c0_1 = arith.constant 0 : index
    %c0_2 = arith.constant 0 : index
    %1 = vector.load %arg1[%c0_1, %c0_2] : memref<3x256xf32, #tpu.memory_space<vmem>>, vector<3x256xf32>
    %2 = arith.subf %0, %1 : vector<3x256xf32>
    %3 = tpu.iota {dimensions = array<i32: 0>} : vector<3x256xi32>
    %cst = arith.constant 0.899999976 : f32
    %4 = vector.broadcast %cst : f32 to vector<3x256xf32>
    %c0_i32 = arith.constant 0 : i32
    %5 = vector.broadcast %c0_i32 : i32 to vector<3x256xi32>
    %6 = arith.cmpi eq, %3, %5 : vector<3x256xi32>
    %cst_3 = arith.constant 1.000000e-01 : f32
    %7 = vector.broadcast %cst_3 : f32 to vector<3x256xf32>
    %8 = arith.select %6, %7, %4 : vector<3x256xi1>, vector<3x256xf32>
    %c1_i32 = arith.constant 1 : i32
    %9 = vector.broadcast %c1_i32 : i32 to vector<3x256xi32>
    %10 = arith.cmpi eq, %3, %9 : vector<3x256xi32>
    %cst_4 = arith.constant 5.000000e-01 : f32
    %11 = vector.broadcast %cst_4 : f32 to vector<3x256xf32>
    %12 = arith.select %10, %11, %8 : vector<3x256xi1>, vector<3x256xf32>
    %cst_5 = arith.constant 1.000000e+00 : f32
    %13 = vector.broadcast %cst_5 : f32 to vector<3x256xf32>
    %14 = arith.subf %12, %13 : vector<3x256xf32>
    %cst_6 = arith.constant 0.000000e+00 : f32
    %15 = vector.broadcast %cst_6 : f32 to vector<3x256xf32>
    %16 = arith.cmpf oge, %2, %15 : vector<3x256xf32>
    %17 = arith.select %16, %12, %14 : vector<3x256xi1>, vector<3x256xf32>
    %18 = arith.mulf %2, %17 : vector<3x256xf32>
    %19 = vector.shape_cast %18 : vector<3x256xf32> to vector<1x3x256xf32>
    %cst_7 = arith.constant dense<0.000000e+00> : vector<1xf32>
    %20 = vector.multi_reduction <add>, %19, %cst_7 [1, 2] : vector<1x3x256xf32> to vector<1xf32>
    %21 = vector.shape_cast %20 : vector<1xf32> to vector<1x1x1xf32>
    %22 = vector.extract %21[0, 0, 0] : f32 from vector<1x1x1xf32>
    %23 = tpu.iota {dimensions = array<i32: 0>} : vector<8x128xi32>
    %24 = tpu.iota {dimensions = array<i32: 1>} : vector<8x128xi32>
    %c0_i32_8 = arith.constant 0 : i32
    %25 = vector.broadcast %c0_i32_8 : i32 to vector<8x128xi32>
    %26 = arith.cmpi eq, %23, %25 : vector<8x128xi32>
    %c0_i32_9 = arith.constant 0 : i32
    %27 = vector.broadcast %c0_i32_9 : i32 to vector<8x128xi32>
    %28 = arith.cmpi eq, %24, %27 : vector<8x128xi32>
    %29 = arith.andi %26, %28 : vector<8x128xi1>
    %cst_10 = arith.constant 0.000000e+00 : f32
    %30 = vector.broadcast %22 : f32 to vector<8x128xf32>
    %31 = vector.broadcast %cst_10 : f32 to vector<8x128xf32>
    %32 = arith.select %29, %30, %31 : vector<8x128xi1>, vector<8x128xf32>
    %c0_11 = arith.constant 0 : index
    %c0_12 = arith.constant 0 : index
    %33 = vector.load %arg3[%c0_11, %c0_12] : memref<8x128xf32, #tpu.memory_space<vmem>>, vector<8x128xf32>
    tpu.vector_store %arg3[%c0_11, %c0_12], %32 {strides = array<i32>} : memref<8x128xf32, #tpu.memory_space<vmem>>, vector<8x128xf32>,
    return
  }
  func.func @transform_0(%arg0: i32) -> (i32, i32) {
    %c0_i32 = arith.constant 0 : i32
    %c0_i32_0 = arith.constant 0 : i32
    return %c0_i32, %arg0 : i32, i32
  }
  func.func @transform_1(%arg0: i32) -> (i32, i32) {
    %c0_i32 = arith.constant 0 : i32
    %c0_i32_0 = arith.constant 0 : i32
    return %c0_i32, %arg0 : i32, i32
  }
  func.func @transform_2(%arg0: i32) -> (i32, i32) {
    %c0_i32 = arith.constant 0 : i32
    %c0_i32_0 = arith.constant 0 : i32
    return %arg0, %c0_i32 : i32, i32
  }
}

</mosaic_0001>

<llo_original>
// kernel: tpu_custom_call.1
$region0: #{tpu_custom_call.1}
  #allocation0 [shape = 'u32[]', space=smem, size = 0x4, offset = 0x4, fixed_abs, tag = 'smem constant byte address 0x4 - core index']
  #allocation1 [shape = 'u32[72,128]{1,0:T(1,128)}', space=vmem, size = 0x9000, scoped, tag = 'internal scratch']
  %s0 = inlined_call_operand.hbm [shape: f32[3,256], index: 0, kind: input, shape index: {}]
  %s1 = inlined_call_operand.hbm [shape: f32[3,256], index: 1, kind: input, shape index: {}]
  %s2 = inlined_call_operand.hbm [shape: f32[8,128], index: 2, kind: output, shape index: {}]
  %s3 = sld [smem:[#allocation0]]
  $region26: #{tpu_custom_call.1} parent=0
    _
  %s5 = ssub.s32 1, %s3
  %s6 = scalar_select 0, %s5, %s3
  $region1: #{tpu_custom_call.1} parent=0
    #allocation2 [shape = 'u8[4096]{0}', space=vmem, size = 0x1000, scoped, tag = 'input window, operand 0, single buffered']
    #allocation3 [shape = 's32[1]{0}', space=sflag, size = 0x4, scoped, tag = 'scoped memory for tpu_custom_call.1']
    #allocation4 [shape = 's32[1]{0}', space=sflag, size = 0x4, scoped, tag = 'scoped memory for tpu_custom_call.1']
    #allocation5 [shape = 'u8[4096]{0}', space=vmem, size = 0x1000, scoped, tag = 'input window, operand 1, single buffered']
    #allocation6 [shape = 's32[1]{0}', space=sflag, size = 0x4, scoped, tag = 'scoped memory for tpu_custom_call.1']
    #allocation7 [shape = 'u8[4096]{0}', space=vmem, size = 0x1000, scoped, tag = 'output window, operand 0, single buffered']
    %7 = vsyncpa [#allocation3], 0
    %8 = vsyncpa [#allocation6], 0
    %9 = vsyncpa [#allocation4], 0
    // Predicated region
    $region2: #{tpu_custom_call.1} parent=1 // pred_check
      _
    $region3: #{tpu_custom_call.1} parent=1 // pred_check_branch
      %11 = sbr.rel (0) target = $region5
    $region4: #{tpu_custom_call.1} parent=1 // pred_region
      %13 = vsyncadd [#allocation3], 0
      %s15 = sshll.u32 %s0, 4
      %s16 = int_to_ptr.hbm [resolvable:$true] %s15
      %s17 = sshll.u32 [#allocation2], 4
      %s18 = int_to_ptr.vmem [resolvable:$true] %s17
      %20 = dma.hbm_to_vmem [thread:$0]  %s16, 128, %s18, [#allocation3]
    $region5: #{tpu_custom_call.1} parent=1 // pred_fallthru
      _
    // Predicated region
    $region6: #{tpu_custom_call.1} parent=1 // pred_check
      _
    $region7: #{tpu_custom_call.1} parent=1 // pred_check_branch
      %22 = sbr.rel (0) target = $region9
    $region8: #{tpu_custom_call.1} parent=1 // pred_region
      %24 = vsyncadd [#allocation6], 0
      %s26 = sshll.u32 %s1, 4
      %s27 = int_to_ptr.hbm [resolvable:$true] %s26
      %s28 = sshll.u32 [#allocation5], 4
      %s29 = int_to_ptr.vmem [resolvable:$true] %s28
      %31 = dma.hbm_to_vmem [thread:$0]  %s27, 128, %s29, [#allocation6]
    $region9: #{tpu_custom_call.1} parent=1 // pred_fallthru
      _
    // Predicated region
    $region10: #{tpu_custom_call.1} parent=1 // pred_check
      _
    $region11: #{tpu_custom_call.1} parent=1 // pred_check_branch
      %33 = sbr.rel (0) target = $region13
    $region12: #{tpu_custom_call.1} parent=1 // pred_region
      %35 = dma.done [#allocation3], 128
    $region13: #{tpu_custom_call.1} parent=1 // pred_fallthru
      _
    // Predicated region
    $region14: #{tpu_custom_call.1} parent=1 // pred_check
      _
    $region15: #{tpu_custom_call.1} parent=1 // pred_check_branch
      %37 = sbr.rel (0) target = $region17
    $region16: #{tpu_custom_call.1} parent=1 // pred_region
      %39 = dma.done [#allocation6], 128
    $region17: #{tpu_custom_call.1} parent=1 // pred_fallthru
      _
    %v40 = vld [vmem:[#allocation5] sm:$0x77]
    %v41 = vld [vmem:[#allocation2] sm:$0x77]
    %v42 = vsub.f32 %v40, %v41
    %v43 = vlaneseq
    %v44 = vshrl.u32 %v43, 7
    %vm45 = vcmp.eq.s32.totalorder %v44, 0
    %v46 = vsel %vm45, 0.1, 0.9
    %vm47 = vcmp.eq.s32.totalorder %v44, 1
    %v48 = vsel %vm47, 0.5, %v46
    %v49 = vsub.f32 %v48, 1.0
    %vm50 = vcmp.ge.f32.partialorder %v42, 0.0
    %v53 = vunpack.c.l.s4 839922192
    %v54 = vunpack.c.0.s8 %v53
    %v55 = vperm.slane %v48, %v54
    %v59 = vunpack.c.l.s4 839922192
    %v60 = vunpack.c.0.s8 %v59
    %v61 = vperm.slane %v49, %v60
    %v63 = vsel %vm50, %v55, %v61
    %v64 = vmul.f32 %v42, %v63
    %66 = vst [vmem:[#allocation1] ss:$2 sm:$0xff] %v64
    %v67 = vld.sshfl [vmem:[#allocation1] sm:$0xff pattern:$0x75316420]
    %v68 = vld.sshfl [vmem:[#allocation1 + $0x8] sm:$0xff pattern:$0x75316420]
    %vm71 = vcmask 1042432
    %v72 = vsel %vm71, %v67, 0.0
    %v73 = vsel %vm71, %v68, 0.0
    %v74 = vadd.f32 %v72, %v73
    %75 = vadd.xlane.f32.xlu0 %v74
    %v76 = vpop.xlane.xlu0 %75
    %v77 = vrot.slane %v76, 4
    %v78 = vadd.f32 %v76, %v77
    %v79 = vrot.slane %v78, 2
    %v80 = vadd.f32 %v78, %v79
    %v81 = vrot.slane %v80, 1
    %v82 = vadd.f32 %v80, %v81
    %s83 = vtos %v82
    %v84 = vlaneseq
    %v85 = vand.u32 %v84, 127
    %vm86 = vcmp.eq.s32.totalorder %v85, 0
    %vm87 = vmand %vm45, %vm86
    %v88 = vstv %s83
    %v89 = vsel %vm87, %v88, 0.0
    %90 = vst [vmem:[#allocation7] sm:$0xff] %v89
    // Predicated region
    $region18: #{tpu_custom_call.1} parent=1 // pred_check
      _
    $region19: #{tpu_custom_call.1} parent=1 // pred_check_branch
      %92 = sbr.rel (0) target = $region21
    $region20: #{tpu_custom_call.1} parent=1 // pred_region
      %94 = vsyncadd [#allocation4], 0
      %s96 = sshll.u32 [#allocation7], 4
      %s97 = int_to_ptr.vmem [resolvable:$true] %s96
      %s98 = sshll.u32 %s2, 4
      %s99 = int_to_ptr.hbm [resolvable:$true] %s98
      %101 = dma.vmem_to_hbm [thread:$0]  %s97, 128, %s99, [#allocation4]
    $region21: #{tpu_custom_call.1} parent=1 // pred_fallthru
      _
    // Predicated region
    $region22: #{tpu_custom_call.1} parent=1 // pred_check
      _
    $region23: #{tpu_custom_call.1} parent=1 // pred_check_branch
      %103 = sbr.rel (0) target = $region25
    $region24: #{tpu_custom_call.1} parent=1 // pred_region
      %105 = dma.done [#allocation4], 128
    $region25: #{tpu_custom_call.1} parent=1 // pred_fallthru
      _
    %106 = vsyncpa [#allocation3], 1
    %107 = vsyncpa [#allocation6], 1
    %108 = vsyncpa [#allocation4], 1

</llo_original>
